<compile_context>
chip_gen: v6e
topology: v6e:2x2x1
jax: 0.10.0
libtpu: 0.0.40
codegen_flags: <defaults>
</compile_context>

<pallas_src>
import jax
import jax.numpy as jnp
from jax.experimental import pallas as pl
from jax.experimental.pallas import tpu as pltpu


# ----------------------------- tiled GCN conv kernel -------------------------

def _make_gcn_kernel(with_score):
    def kernel(nz_ref, a_ref, x_ref, w_ref, b_ref, rs_ref, *rest):
        if with_score:
            p_ref, o_ref, s_ref, acc_ref = rest
        else:
            o_ref, acc_ref = rest
        i = pl.program_id(0)
        k = pl.program_id(1)
        nk = pl.num_programs(1)

        @pl.when(k == 0)
        def _():
            acc_ref[...] = jnp.zeros_like(acc_ref)

        # Skip all MXU work for all-zero adjacency blocks (graph sparsity).
        @pl.when(nz_ref[i * nk + k] > 0)
        def _():
            xw = jnp.dot(x_ref[...], w_ref[...],
                         preferred_element_type=jnp.float32)
            acc_ref[...] += jnp.dot(a_ref[...], xw.astype(jnp.bfloat16),
                                    preferred_element_type=jnp.float32)

        @pl.when(k == nk - 1)
        def _():
            out = jnp.maximum(rs_ref[...] * acc_ref[...] + b_ref[...], 0.0)
            o_ref[...] = out.astype(o_ref.dtype)
            if with_score:
                # fused TopKPooling score (x2 @ p)/||p|| as a VPU reduction
                s_ref[...] = jnp.sum(out * p_ref[...], axis=-1, keepdims=True)
    return kernel


_gcn_kernel = _make_gcn_kernel(False)
_gcn_score_kernel = _make_gcn_kernel(True)


def gcn_conv(a_tilde_bf16, nz_blocks, x_in, w, b, col_scale, row_scale,
             *, tile, p_hat=None):
    """relu(normalized-adjacency @ (x @ w) + b); optionally fused TopK score."""
    n_pad = a_tilde_bf16.shape[0]
    f = x_in.shape[1]
    nb = w.shape[1]
    n_blk = n_pad // tile

    # Fold the column normalization / keep mask into X (tiny: N x F elementwise)
    x_scaled = (col_scale[:, None] * x_in.astype(jnp.float32)).astype(jnp.bfloat16)
    rs = row_scale[:, None].astype(jnp.float32)              # (n_pad, 1)
    w_bf = w.astype(jnp.bfloat16)

    in_specs = [
        pl.BlockSpec((tile, tile), lambda i, k, nz: (i, k)),   # A_tilde block
        pl.BlockSpec((tile, f),    lambda i, k, nz: (k, 0)),   # X' k-tile
        pl.BlockSpec((f, nb),      lambda i, k, nz: (0, 0)),   # W (resident)
        pl.BlockSpec((1, nb),      lambda i, k, nz: (0, 0)),   # bias
        pl.BlockSpec((tile, 1),    lambda i, k, nz: (i, 0)),   # epilogue row scale
    ]
    args = [a_tilde_bf16, x_scaled, w_bf, b, rs]

    if p_hat is None:
        kernel = _gcn_kernel
        out_shape = jax.ShapeDtypeStruct((n_pad, nb), jnp.bfloat16)
        out_specs = pl.BlockSpec((tile, nb), lambda i, k, nz: (i, 0))
    else:
        kernel = _gcn_score_kernel
        in_specs.append(pl.BlockSpec((1, nb), lambda i, k, nz: (0, 0)))  # p / ||p||
        args.append(p_hat)
        out_shape = (jax.ShapeDtypeStruct((n_pad, nb), jnp.bfloat16),
                     jax.ShapeDtypeStruct((n_pad, 1), jnp.float32))
        out_specs = (pl.BlockSpec((tile, nb), lambda i, k, nz: (i, 0)),
                     pl.BlockSpec((tile, 1),  lambda i, k, nz: (i, 0)))

    return pl.pallas_call(
        kernel,
        out_shape=out_shape,
        grid_spec=pltpu.PrefetchScalarGridSpec(
            num_scalar_prefetch=1,
            grid=(n_blk, n_blk),
            in_specs=in_specs,
            out_specs=out_specs,
            scratch_shapes=[pltpu.VMEM((tile, nb), jnp.float32)]),
        compiler_params=pltpu.CompilerParams(
            dimension_semantics=("parallel", "arbitrary")),
    )(nz_blocks, *args)


# -------------------- fused global_mean_pool + MLP head kernel ---------------

def pool_head_kernel(m_ref, x_ref, w1_ref, b1_ref, w2_ref, b2_ref, o_ref):
    pooled = jnp.dot(m_ref[...], x_ref[...].astype(jnp.float32),
                     preferred_element_type=jnp.float32)
    h = jnp.maximum(
        jnp.dot(pooled, w1_ref[...], preferred_element_type=jnp.float32)
        + b1_ref[...], 0.0)
    z = jnp.dot(h, w2_ref[...], preferred_element_type=jnp.float32) + b2_ref[...]
    zmax = jnp.max(z, axis=-1, keepdims=True)
    lse = jnp.log(jnp.sum(jnp.exp(z - zmax), axis=-1, keepdims=True)) + zmax
    o_ref[...] = z - lse


def _full_spec(shape):
    nd = len(shape)
    return pl.BlockSpec(tuple(shape), lambda i, nd=nd: (0,) * nd)


def pool_head(m, x3, w1, b1, w2, b2):
    g, c = m.shape[0], w2.shape[1]
    args = (m, x3, w1, b1, w2, b2)
    out_shape = jax.ShapeDtypeStruct((g, c), jnp.float32)
    return pl.pallas_call(
        pool_head_kernel,
        out_shape=out_shape,
        grid=(1,),
        in_specs=[_full_spec(a.shape) for a in args],
        out_specs=_full_spec(out_shape.shape),
        compiler_params=pltpu.CompilerParams(dimension_semantics=("arbitrary",)),
    )(*args)


# --------------------------------- JAX glue ----------------------------------

def init_params(key, num_features, output_channels, nb_neurons=128):
    ks = jax.random.split(key, 8)

    def glorot(k, shape):
        limit = jnp.sqrt(6.0 / (shape[0] + shape[1]))
        return jax.random.uniform(k, shape, jnp.float32, -limit, limit)

    return dict(
        w1=glorot(ks[0], (num_features, nb_neurons)),
        b1=jnp.zeros((1, nb_neurons), jnp.float32),
        w2=glorot(ks[1], (nb_neurons, nb_neurons)),
        b2=jnp.zeros((1, nb_neurons), jnp.float32),
        p=glorot(ks[2], (nb_neurons, 1)),                      # TopKPooling weight
        w3=glorot(ks[3], (nb_neurons, nb_neurons)),
        b3=jnp.zeros((1, nb_neurons), jnp.float32),
        w_lin1=glorot(ks[4], (nb_neurons, 64)),
        b_lin1=0.1 * jax.random.normal(ks[5], (1, 64), jnp.float32),
        w_lin2=glorot(ks[6], (64, output_channels)),
        b_lin2=0.1 * jax.random.normal(ks[7], (1, output_channels), jnp.float32),
    )


def gcn_conv1tpk_forward(params, x, edge_index, batch, num_graphs,
                         ratio=0.8, tile=128):
    n, f = x.shape
    nb = params["w1"].shape[1]
    n_pad = ((n + tile - 1) // tile) * tile
    n_blk = n_pad // tile

    valid = (jnp.arange(n_pad) < n).astype(jnp.float32)
    x_p = jnp.zeros((n_pad, f), jnp.float32).at[:n].set(x)
    batch_p = jnp.full((n_pad,), num_graphs, jnp.int32).at[:n].set(batch)

    # single dense adjacency (+ self loops for real nodes), streamed as bf16
    src, dst = edge_index[0], edge_index[1]
    adj = jnp.zeros((n_pad, n_pad), jnp.float32).at[dst, src].set(1.0)
    a_tilde = adj + jnp.diag(valid)
    a_bf16 = a_tilde.astype(jnp.bfloat16)

    # per-block nonzero flags -> scalar prefetch; all-zero blocks skip MXU work
    nz_blocks = (a_tilde.reshape(n_blk, tile, n_blk, tile)
                 .sum(axis=(1, 3)) > 0).astype(jnp.int32).reshape(-1)

    # conv1 / conv2 normalization: D^{-1/2} (A+I) D^{-1/2}
    deg = jnp.sum(a_tilde, axis=1)
    dinv = jnp.where(deg > 0, jax.lax.rsqrt(jnp.maximum(deg, 1e-12)), 0.0)

    x1 = gcn_conv(a_bf16, nz_blocks, x_p, params["w1"], params["b1"],
                  dinv, dinv, tile=tile)

    p = params["p"]
    p_hat = (p / jnp.sqrt(jnp.sum(p * p))).reshape(1, nb)
    x2, score = gcn_conv(a_bf16, nz_blocks, x1, params["w2"], params["b2"],
                         dinv, dinv, tile=tile, p_hat=p_hat)
    score = score[:, 0]

    # ------------------------- TopKPooling (ratio=0.8) -----------------------
    # TODO(synk): per-graph top-k ranking stays in JAX glue (data-dependent
    # sort/select has no clean tile-level Pallas mapping).
    idx = jnp.arange(n_pad)
    same_graph = batch_p[:, None] == batch_p[None, :]
    higher = (score[None, :] > score[:, None]) | (
        (score[None, :] == score[:, None]) & (idx[None, :] < idx[:, None]))
    rank = jnp.sum(jnp.where(same_graph & higher, 1, 0), axis=1)
    counts = jnp.sum(batch_p[None, :] == jnp.arange(num_graphs)[:, None], axis=1)
    k = jnp.ceil(ratio * counts.astype(jnp.float32)).astype(jnp.int32)
    k_node = k[jnp.clip(batch_p, 0, num_graphs - 1)]
    keep = (rank < k_node).astype(jnp.float32) * valid       # 1.0 = node survives

    gate = jnp.tanh(score) * keep                            # TopKPooling tanh gate
    x_pool = x2.astype(jnp.float32) * gate[:, None]

    # conv3 on the filtered sub-graph: keep-masked adjacency + self loops for
    # surviving nodes, expressed purely as per-node row/col scales over the
    # SAME dense a_tilde (no second N x N array).
    deg3 = keep * (a_tilde @ keep)
    dinv3 = jnp.where(deg3 > 0, jax.lax.rsqrt(jnp.maximum(deg3, 1e-12)), 0.0)
    s3 = keep * dinv3
    x3 = gcn_conv(a_bf16, nz_blocks, x_pool, params["w3"], params["b3"],
                  s3, s3, tile=tile)

    # -------- global_mean_pool + lin1 -> relu -> lin2 -> log_softmax ---------
    onehot = (batch_p[None, :] == jnp.arange(num_graphs)[:, None]).astype(jnp.float32)
    onehot = onehot * keep[None, :]
    cnt = jnp.sum(onehot, axis=1, keepdims=True)
    m = onehot / jnp.maximum(cnt, 1.0)
    return pool_head(m, x3, params["w_lin1"], params["b_lin1"],
                     params["w_lin2"], params["b_lin2"])


# ----------------------------------- main -------------------------------------

if __name__ == "__main__":
    key = jax.random.PRNGKey(0)
    num_features, output_channels, nb_neurons = 16, 8, 128
    nodes_per_graph, num_graphs = 128, 2          # N = 256 -> 2x2 block grid
    N = nodes_per_graph * num_graphs

    k_x, k_p = jax.random.split(key)
    params = init_params(k_p, num_features, output_channels, nb_neurons)
    x = jax.random.normal(k_x, (N, num_features), jnp.float32)

    # two ring graphs (undirected: both edge directions stored)
    src, dst = [], []
    for g in range(num_graphs):
        base = g * nodes_per_graph
        for i in range(nodes_per_graph):
            a, b = base + i, base + (i + 1) % nodes_per_graph
            src += [a, b]
            dst += [b, a]
    edge_index = jnp.array([src, dst], jnp.int32)
    batch = jnp.repeat(jnp.arange(num_graphs, dtype=jnp.int32), nodes_per_graph)

    out = gcn_conv1tpk_forward(params, x, edge_index, batch, num_graphs)
    out = jax.block_until_ready(out)

    assert out.shape == (num_graphs, output_channels)
    assert bool(jnp.all(jnp.isfinite(out)))
    # log_softmax rows should exponentiate to ~1
    assert bool(jnp.allclose(jnp.sum(jnp.exp(out), axis=-1), 1.0, atol=1e-4))
    print("KERNEL_OK")
</pallas_src>

<mosaic_0001>
module attributes {stable_mosaic.version = 11 : i64} {
  func.func @kernel(%arg0: i32, %arg1: i32, %arg2: memref<4xi32, #tpu.memory_space<smem>>, %arg3: memref<128x128xbf16, #tpu.memory_space<vmem>>, %arg4: memref<128x16xbf16, #tpu.memory_space<vmem>>, %arg5: memref<16x128xbf16, #tpu.memory_space<vmem>>, %arg6: memref<1x128xf32, #tpu.memory_space<vmem>>, %arg7: memref<128x1xf32, #tpu.memory_space<vmem>>, %arg8: memref<128x128xbf16, #tpu.memory_space<vmem>>, %arg9: memref<128x128xf32, #tpu.memory_space<vmem>>) attributes {dimension_semantics = [#tpu.dimension_semantics<parallel>, #tpu.dimension_semantics<arbitrary>], iteration_bounds = array<i64: 2, 2>, scalar_prefetch = 1 : i64, scratch_operands = 1 : i64, tpu.core_type = #tpu.core_type<tc>, window_params = [{transform_indices = @transform_0, window_bounds = array<i64: 128, 128>}, {transform_indices = @transform_1, window_bounds = array<i64: 128, 16>}, {pipeline_mode = #tpu.pipeline_mode<synchronous>, transform_indices = @transform_2, window_bounds = array<i64: 16, 128>}, {pipeline_mode = #tpu.pipeline_mode<synchronous>, transform_indices = @transform_3, window_bounds = array<i64: 1, 128>}, {transform_indices = @transform_4, window_bounds = array<i64: 128, 1>}, {transform_indices = @transform_5, window_bounds = array<i64: 128, 128>}]} {
    %c0_i32 = arith.constant 0 : i32
    %0 = arith.cmpi eq, %arg1, %c0_i32 : i32
    %1 = arith.extui %0 : i1 to i32
    %c0_i32_0 = arith.constant 0 : i32
    %2 = arith.cmpi ne, %1, %c0_i32_0 : i32
    scf.if %2 {
      %cst = arith.constant 0.000000e+00 : f32
      %13 = vector.broadcast %cst : f32 to vector<128x128xf32>
      %c0 = arith.constant 0 : index
      %c0_4 = arith.constant 0 : index
      %14 = vector.load %arg9[%c0, %c0_4] : memref<128x128xf32, #tpu.memory_space<vmem>>, vector<128x128xf32>
      tpu.vector_store %arg9[%c0, %c0_4], %13 {strides = array<i32>} : memref<128x128xf32, #tpu.memory_space<vmem>>, vector<128x128xf32>,
    } else {
    }
    %c2_i32 = arith.constant 2 : i32
    %3 = arith.muli %arg0, %c2_i32 : i32
    %4 = arith.addi %3, %arg1 : i32
    %5 = arith.index_cast %4 : i32 to index
    %6 = memref.load %arg2[%5] : memref<4xi32, #tpu.memory_space<smem>>
    %c0_i32_1 = arith.constant 0 : i32
    %7 = arith.cmpi sgt, %6, %c0_i32_1 : i32
    %8 = arith.extui %7 : i1 to i32
    %c0_i32_2 = arith.constant 0 : i32
    %9 = arith.cmpi ne, %8, %c0_i32_2 : i32
    scf.if %9 {
      %c0 = arith.constant 0 : index
      %c0_4 = arith.constant 0 : index
      %13 = vector.load %arg4[%c0, %c0_4] : memref<128x16xbf16, #tpu.memory_space<vmem>>, vector<128x16xbf16>
      %c0_5 = arith.constant 0 : index
      %c0_6 = arith.constant 0 : index
      %14 = vector.load %arg5[%c0_5, %c0_6] : memref<16x128xbf16, #tpu.memory_space<vmem>>, vector<16x128xbf16>
      %cst = arith.constant dense<0.000000e+00> : vector<128x128xf32>
      %15 = tpu.matmul %13, %14, %cst {dimension_numbers = #tpu.dot_dimension_numbers<[1], [0], [0], [1], [0, 0, 1, 1], [], []>} : vector<128x16xbf16>, vector<16x128xbf16>, vector<128x128xf32> -> vector<128x128xf32>
      %c0_7 = arith.constant 0 : index
      %c0_8 = arith.constant 0 : index
      %16 = vector.load %arg9[%c0_7, %c0_8] : memref<128x128xf32, #tpu.memory_space<vmem>>, vector<128x128xf32>
      %c0_9 = arith.constant 0 : index
      %c0_10 = arith.constant 0 : index
      %17 = vector.load %arg3[%c0_9, %c0_10] : memref<128x128xbf16, #tpu.memory_space<vmem>>, vector<128x128xbf16>
      %18 = arith.truncf %15 : vector<128x128xf32> to vector<128x128xbf16>
      %cst_11 = arith.constant dense<0.000000e+00> : vector<128x128xf32>
      %19 = tpu.matmul %17, %18, %cst_11 {dimension_numbers = #tpu.dot_dimension_numbers<[1], [0], [0], [1], [0, 0, 1, 1], [], []>} : vector<128x128xbf16>, vector<128x128xbf16>, vector<128x128xf32> -> vector<128x128xf32>
      %20 = arith.addf %16, %19 : vector<128x128xf32>
      %c0_12 = arith.constant 0 : index
      %c0_13 = arith.constant 0 : index
      %21 = vector.load %arg9[%c0_12, %c0_13] : memref<128x128xf32, #tpu.memory_space<vmem>>, vector<128x128xf32>
      tpu.vector_store %arg9[%c0_12, %c0_13], %20 {strides = array<i32>} : memref<128x128xf32, #tpu.memory_space<vmem>>, vector<128x128xf32>,
    } else {
    }
    %c1_i32 = arith.constant 1 : i32
    %10 = arith.cmpi eq, %arg1, %c1_i32 : i32
    %11 = arith.extui %10 : i1 to i32
    %c0_i32_3 = arith.constant 0 : i32
    %12 = arith.cmpi ne, %11, %c0_i32_3 : i32
    scf.if %12 {
      %c0 = arith.constant 0 : index
      %c0_4 = arith.constant 0 : index
      %13 = vector.load %arg7[%c0, %c0_4] : memref<128x1xf32, #tpu.memory_space<vmem>>, vector<128x1xf32>
      %c0_5 = arith.constant 0 : index
      %c0_6 = arith.constant 0 : index
      %14 = vector.load %arg9[%c0_5, %c0_6] : memref<128x128xf32, #tpu.memory_space<vmem>>, vector<128x128xf32>
      %15 = vector.broadcast %13 : vector<128x1xf32> to vector<128x128xf32>
      %16 = arith.mulf %15, %14 : vector<128x128xf32>
      %c0_7 = arith.constant 0 : index
      %c0_8 = arith.constant 0 : index
      %17 = vector.load %arg6[%c0_7, %c0_8] : memref<1x128xf32, #tpu.memory_space<vmem>>, vector<1x128xf32>
      %18 = vector.broadcast %17 : vector<1x128xf32> to vector<128x128xf32>
      %19 = arith.addf %16, %18 : vector<128x128xf32>
      %cst = arith.constant 0.000000e+00 : f32
      %20 = vector.broadcast %cst : f32 to vector<128x128xf32>
      %21 = arith.maximumf %19, %20 : vector<128x128xf32>
      %22 = arith.truncf %21 : vector<128x128xf32> to vector<128x128xbf16>
      %c0_9 = arith.constant 0 : index
      %c0_10 = arith.constant 0 : index
      %23 = vector.load %arg8[%c0_9, %c0_10] : memref<128x128xbf16, #tpu.memory_space<vmem>>, vector<128x128xbf16>
      tpu.vector_store %arg8[%c0_9, %c0_10], %22 {strides = array<i32>} : memref<128x128xbf16, #tpu.memory_space<vmem>>, vector<128x128xbf16>,
    } else {
    }
    return
  }
  func.func @transform_0(%arg0: i32, %arg1: i32, %arg2: memref<4xi32, #tpu.memory_space<smem>>) -> (i32, i32) {
    %c0_i32 = arith.constant 0 : i32
    return %arg0, %arg1 : i32, i32
  }
  func.func @transform_1(%arg0: i32, %arg1: i32, %arg2: memref<4xi32, #tpu.memory_space<smem>>) -> (i32, i32) {
    %c0_i32 = arith.constant 0 : i32
    %c0_i32_0 = arith.constant 0 : i32
    return %arg1, %c0_i32 : i32, i32
  }
  func.func @transform_2(%arg0: i32, %arg1: i32, %arg2: memref<4xi32, #tpu.memory_space<smem>>) -> (i32, i32) {
    %c0_i32 = arith.constant 0 : i32
    %c0_i32_0 = arith.constant 0 : i32
    %c0_i32_1 = arith.constant 0 : i32
    return %c0_i32, %c0_i32_0 : i32, i32
  }
  func.func @transform_3(%arg0: i32, %arg1: i32, %arg2: memref<4xi32, #tpu.memory_space<smem>>) -> (i32, i32) {
    %c0_i32 = arith.constant 0 : i32
    %c0_i32_0 = arith.constant 0 : i32
    %c0_i32_1 = arith.constant 0 : i32
    return %c0_i32, %c0_i32_0 : i32, i32
  }
  func.func @transform_4(%arg0: i32, %arg1: i32, %arg2: memref<4xi32, #tpu.memory_space<smem>>) -> (i32, i32) {
    %c0_i32 = arith.constant 0 : i32
    %c0_i32_0 = arith.constant 0 : i32
    return %arg0, %c0_i32 : i32, i32
  }
  func.func @transform_5(%arg0: i32, %arg1: i32, %arg2: memref<4xi32, #tpu.memory_space<smem>>) -> (i32, i32) {
    %c0_i32 = arith.constant 0 : i32
    %c0_i32_0 = arith.constant 0 : i32
    return %arg0, %c0_i32 : i32, i32
  }
}

</mosaic_0001>

<llo_original>
// kernel: tpu_custom_call.1
$region0: #{tpu_custom_call.1}
  #allocation0 [shape = 'u32[]', space=smem, size = 0x4, offset = 0x4, fixed_abs, tag = 'smem constant byte address 0x4 - core index']
  #allocation1 [shape = 'u32[144,128]{1,0:T(1,128)}', space=vmem, size = 0x12000, scoped, tag = 'internal scratch']
  #allocation2 [shape = 'f32[128,128]{1,0:T(8,128)}', space=vmem, size = 0x10000, scoped, tag = 'scratch operand']
  #allocation3 [shape = 's32[1]{0}', space=sflag, size = 0x4, scoped, tag = 'scoped memory for tpu_custom_call.1']
  #allocation4 [shape = 'u8[512]{0}', space=smem, size = 0x200, scoped, tag = 'prefetched SMEM operand 0']
  %s0 = inlined_call_operand.vmem [shape: s32[4], index: 0, kind: input, shape index: {}]
  %s1 = inlined_call_operand.vmem [shape: bf16[256,256], index: 1, kind: input, shape index: {}]
  %s2 = inlined_call_operand.vmem [shape: bf16[256,16], index: 2, kind: input, shape index: {}]
  %s3 = inlined_call_operand.vmem [shape: bf16[16,128], index: 3, kind: input, shape index: {}]
  %s4 = inlined_call_operand.vmem [shape: f32[1,128], index: 4, kind: input, shape index: {}]
  %s5 = inlined_call_operand.vmem [shape: f32[256,1], index: 5, kind: input, shape index: {}]
  %s6 = inlined_call_operand.hbm [shape: bf16[256,128], index: 6, kind: output, shape index: {}]
  %s7 = sld [smem:[#allocation0]]
  $region106: #{tpu_custom_call.1} parent=0
    _
  %s9 = ssub.s32 1, %s7
  %s10 = scalar_select 0, %s9, %s7
  %s11 = sshll.u32 %s0, 4
  %s12 = int_to_ptr.vmem [resolvable:$true] %s11
  %14 = dma.vmem_to_smem %s12, 16, [#allocation4], [#allocation3]
  %15 = dma.done [#allocation3], 16
  %16 = sfence
  $region1: #{tpu_custom_call.1} parent=0
    #allocation5 [shape = 'u8[65536]{0}', space=vmem, size = 0x10000, scoped, tag = 'input window, operand 1']
    #allocation6 [shape = 'u8[65536]{0}', space=vmem, size = 0x10000, scoped, tag = 'output window, operand 0']
    #allocation7 [shape = 's32[2]{0}', space=sflag, size = 0x8, scoped, tag = 'scoped memory for tpu_custom_call.1']
    %17 = vsyncpa [#allocation7], 0
    %s18 = scalar_lea.sflag [#allocation7], 1
    %19 = vsyncpa %s18, 0
    loop: start=0, step=1, limit=6
    $region2: #{tpu_custom_call.1} parent=1 // loop_pre_header
      _
    $region3: #{tpu_custom_call.1} parent=1 // loop_header
      %s21 = sphi 0, %s25
      %p22 = scmp.ge.s32.totalorder %s21, 6
      %s28 = sphi 0, %s40
      %s29 = sphi 0, %s36
      %s30 = sphi 0, %s28
      %s31 = sphi 0, %s29
      %s32 = sphi 0, %s30
      %s33 = sphi 0, %s31
      %s45 = sphi 0, %s47
      %s48 = sphi 0, %s45
      %s49 = sphi 0, %s48
      %s65 = sphi 0, %s49
      %s71 = sphi 0, %s73
      %s74 = sphi 0, %s71
      %s75 = sphi 0, %s74
      %s91 = sphi 0, %s75
      %s95 = sphi 0, %s95
      %s97 = sphi 0, %s95
      %s98 = sphi 0, %s97
      %s112 = sphi 0, %s98
      %s116 = sphi 0, %s116
      %s118 = sphi 0, %s116
      %s119 = sphi 0, %s118
      %s133 = sphi 0, %s119
      %s139 = sphi 0, %s141
      %s142 = sphi 0, %s139
      %s143 = sphi 0, %s142
      %s159 = sphi 0, %s143
      %s165 = sphi 0, %s167
      %s168 = sphi 0, %s165
      %s169 = sphi 0, %s168
      %s185 = sphi 0, %s169
    $region4: #{tpu_custom_call.1} parent=1 // loop_header_branch
      %24 = sbr.rel (%p22) target = $region8
    $region5: #{tpu_custom_call.1} parent=1 // loop_body
      %s26 = ssub.s32 %s21, 1
      %s27 = ssub.s32 %s21, 2
      %s34 = sadd.s32 1, %s29
      %p35 = scmp.ge.s32.totalorder %s34, 2
      %s36 = scalar_select %p35, 0, %s34
      %s37 = sadd.s32 1, %s28
      %s38 = scalar_select %p35, %s37, %s28
      %p39 = scmp.ge.s32.totalorder %s38, 2
      %s40 = scalar_select %p39, 0, %s38
      %s41 = ssub.s32 %s28, %s40
      %s42 = ssub.s32 %s29, %s36
      %s43 = sor.u32 %s41, %s42
      %p44 = scmp.eq.s32.totalorder %s43, 0
      %s46 = sadd.s32 %s45, 1
      %s47 = scalar_select %p44, %s45, %s46
      %p50 = pneg %p44
      %p51 = scmp.eq.s32.totalorder %s21, 3
      %p52 = por %p50, %p51
      %p53 = scmp.ne.s32.totalorder %s45, %s48
      %p54 = scmp.eq.s32.totalorder %s21, 0
      %p55 = por %p53, %p54
      %p56 = scmp.ne.s32.totalorder %s45, %s48
      %p57 = scmp.eq.s32.totalorder %s26, 3
      %p58 = por %p56, %p57
      %p59 = scmp.ne.s32.totalorder %s48, %s49
      %p60 = scmp.eq.s32.totalorder %s26, 0
      %p61 = por %p59, %p60
      %p62 = scmp.ne.s32.totalorder %s48, %s49
      %p63 = scmp.eq.s32.totalorder %s27, 3
      %p64 = por %p62, %p63
      %p66 = scmp.ne.s32.totalorder %s49, %s65
      %p67 = scmp.eq.s32.totalorder %s27, 0
      %p68 = por %p66, %p67
      %s69 = ssub.s32 %s29, %s36
      %p70 = scmp.eq.s32.totalorder %s69, 0
      %s72 = sadd.s32 %s71, 1
      %s73 = scalar_select %p70, %s71, %s72
      %p76 = pneg %p70
      %p77 = scmp.eq.s32.totalorder %s21, 3
      %p78 = por %p76, %p77
      %p79 = scmp.ne.s32.totalorder %s71, %s74
      %p80 = scmp.eq.s32.totalorder %s21, 0
      %p81 = por %p79, %p80
      %p82 = scmp.ne.s32.totalorder %s71, %s74
      %p83 = scmp.eq.s32.totalorder %s26, 3
      %p84 = por %p82, %p83
      %p85 = scmp.ne.s32.totalorder %s74, %s75
      %p86 = scmp.eq.s32.totalorder %s26, 0
      %p87 = por %p85, %p86
      %p88 = scmp.ne.s32.totalorder %s74, %s75
      %p89 = scmp.eq.s32.totalorder %s27, 3
      %p90 = por %p88, %p89
      %p92 = scmp.ne.s32.totalorder %s75, %s91
      %p93 = scmp.eq.s32.totalorder %s27, 0
      %p94 = por %p92, %p93
      %s96 = sadd.s32 %s95, 1
      %p99 = scmp.eq.s32.totalorder %s21, 3
      %p100 = scmp.ne.s32.totalorder %s95, %s97
      %p101 = scmp.eq.s32.totalorder %s21, 0
      %p102 = por %p100, %p101
      %p103 = scmp.ne.s32.totalorder %s95, %s97
      %p104 = scmp.eq.s32.totalorder %s26, 3
      %p105 = por %p103, %p104
      %p106 = scmp.ne.s32.totalorder %s97, %s98
      %p107 = scmp.eq.s32.totalorder %s26, 0
      %p108 = por %p106, %p107
      %p109 = scmp.ne.s32.totalorder %s97, %s98
      %p110 = scmp.eq.s32.totalorder %s27, 3
      %p111 = por %p109, %p110
      %p113 = scmp.ne.s32.totalorder %s98, %s112
      %p114 = scmp.eq.s32.totalorder %s27, 0
      %p115 = por %p113, %p114
      %s117 = sadd.s32 %s116, 1
      %p120 = scmp.eq.s32.totalorder %s21, 3
      %p121 = scmp.ne.s32.totalorder %s116, %s118
      %p122 = scmp.eq.s32.totalorder %s21, 0
      %p123 = por %p121, %p122
      %p124 = scmp.ne.s32.totalorder %s116, %s118
      %p125 = scmp.eq.s32.totalorder %s26, 3
      %p126 = por %p124, %p125
      %p127 = scmp.ne.s32.totalorder %s118, %s119
      %p128 = scmp.eq.s32.totalorder %s26, 0
      %p129 = por %p127, %p128
      %p130 = scmp.ne.s32.totalorder %s118, %s119
      %p131 = scmp.eq.s32.totalorder %s27, 3
      %p132 = por %p130, %p131
      %p134 = scmp.ne.s32.totalorder %s119, %s133
      %p135 = scmp.eq.s32.totalorder %s27, 0
      %p136 = por %p134, %p135
      %s137 = ssub.s32 %s28, %s40
      %p138 = scmp.eq.s32.totalorder %s137, 0
      %s140 = sadd.s32 %s139, 1
      %s141 = scalar_select %p138, %s139, %s140
      %p144 = pneg %p138
      %p145 = scmp.eq.s32.totalorder %s21, 3
      %p146 = por %p144, %p145
      %p147 = scmp.ne.s32.totalorder %s139, %s142
      %p148 = scmp.eq.s32.totalorder %s21, 0
      %p149 = por %p147, %p148
      %p150 = scmp.ne.s32.totalorder %s139, %s142
      %p151 = scmp.eq.s32.totalorder %s26, 3
      %p152 = por %p150, %p151
      %p153 = scmp.ne.s32.totalorder %s142, %s143
      %p154 = scmp.eq.s32.totalorder %s26, 0
      %p155 = por %p153, %p154
      %p156 = scmp.ne.s32.totalorder %s142, %s143
      %p157 = scmp.eq.s32.totalorder %s27, 3
      %p158 = por %p156, %p157
      %p160 = scmp.ne.s32.totalorder %s143, %s159
      %p161 = scmp.eq.s32.totalorder %s27, 0
      %p162 = por %p160, %p161
      %s163 = ssub.s32 %s28, %s40
      %p164 = scmp.eq.s32.totalorder %s163, 0
      %s166 = sadd.s32 %s165, 1
      %s167 = scalar_select %p164, %s165, %s166
      %p170 = pneg %p164
      %p171 = scmp.eq.s32.totalorder %s21, 3
      %p172 = por %p170, %p171
      %p173 = scmp.ne.s32.totalorder %s165, %s168
      %p174 = scmp.eq.s32.totalorder %s21, 0
      %p175 = por %p173, %p174
      %p176 = scmp.ne.s32.totalorder %s165, %s168
      %p177 = scmp.eq.s32.totalorder %s26, 3
      %p178 = por %p176, %p177
      %p179 = scmp.ne.s32.totalorder %s168, %s169
      %p180 = scmp.eq.s32.totalorder %s26, 0
      %p181 = por %p179, %p180
      %p182 = scmp.ne.s32.totalorder %s168, %s169
      %p183 = scmp.eq.s32.totalorder %s27, 3
      %p184 = por %p182, %p183
      %p186 = scmp.ne.s32.totalorder %s169, %s185
      %p187 = scmp.eq.s32.totalorder %s27, 0
      %p188 = por %p186, %p187
      %p189 = scmp.le.s32.totalorder 1, %s21
      %p190 = scmp.lt.s32.totalorder %s21, 5
      %p191 = pnand %p189, %p190
      %p192 = pneg %p191
      // Predicated region
      $region9: #{tpu_custom_call.1} parent=5 // pred_check
        _
      $region10: #{tpu_custom_call.1} parent=5 // pred_check_branch
        %194 = sbr.rel (%p191) target = $region12
      $region11: #{tpu_custom_call.1} parent=5 // pred_region
        %s195 = ssub.s32 %s21, 1
        // Predicated region
        $region13: #{tpu_custom_call.1} parent=11 // pred_check
          %p196 = pneg %p108
        $region14: #{tpu_custom_call.1} parent=11 // pred_check_branch
          %198 = sbr.rel (%p196) target = $region16
        $region15: #{tpu_custom_call.1} parent=11 // pred_region
          _
        $region16: #{tpu_custom_call.1} parent=11 // pred_fallthru
          _
        // Predicated region
        $region17: #{tpu_custom_call.1} parent=11 // pred_check
          %p199 = pneg %p129
        $region18: #{tpu_custom_call.1} parent=11 // pred_check_branch
          %201 = sbr.rel (%p199) target = $region20
        $region19: #{tpu_custom_call.1} parent=11 // pred_region
          _
        $region20: #{tpu_custom_call.1} parent=11 // pred_fallthru
          _
      $region12: #{tpu_custom_call.1} parent=5 // pred_fallthru
        _
      %p202 = scmp.lt.s32.totalorder %s21, 4
      // Predicated region
      $region21: #{tpu_custom_call.1} parent=5 // pred_check
        %p203 = pneg %p202
      $region22: #{tpu_custom_call.1} parent=5 // pred_check_branch
        %205 = sbr.rel (%p203) target = $region24
      $region23: #{tpu_custom_call.1} parent=5 // pred_region
        // Predicated region
        $region25: #{tpu_custom_call.1} parent=23 // pred_check
          %p206 = pneg %p55
        $region26: #{tpu_custom_call.1} parent=23 // pred_check_branch
          %208 = sbr.rel (%p206) target = $region28
        $region27: #{tpu_custom_call.1} parent=23 // pred_region
          %s209 = sand.u32 %s45, 1
          %s210 = sand.u32 %s45, 1
          %s211 = smul.addr %s210, 64
          %s212 = scalar_lea.vmem [#allocation5], %s211
          %s213 = smul.u32 16, %s28
          %s214 = smul.addr %s213, 2
          %s215 = sadd.s32 %s29, %s214
          %s216 = smul.addr %s215, 4
          %s217 = scalar_lea.vmem %s1, %s216
          // Predicated region
          $region29: #{tpu_custom_call.1} parent=27 // pred_check
            _
          $region30: #{tpu_custom_call.1} parent=27 // pred_check_branch
            %219 = sbr.rel (0) target = $region32
          $region31: #{tpu_custom_call.1} parent=27 // pred_region
            // Predicated region
            $region33: #{tpu_custom_call.1} parent=31 // pred_check
              _
            $region34: #{tpu_custom_call.1} parent=31 // pred_check_branch
              %221 = sbr.rel target = $region36
            $region35: #{tpu_custom_call.1} parent=31 // pred_region
              // Predicated region
              $region48: #{tpu_custom_call.1} parent=35 // pred_check
                _
              $region49: #{tpu_custom_call.1} parent=35 // pred_check_branch
                %267 = sbr.rel (0) target = $region51
              $region50: #{tpu_custom_call.1} parent=35 // pred_region
                loop: start=0, step=1, limit=1
                $region52: #{tpu_custom_call.1} parent=50 // loop_pre_header
                  _
                $region53: #{tpu_custom_call.1} parent=50 // loop_header
                  %s269 = sphi 0, %s273
                  %p270 = scmp.ge.s32.totalorder %s269, 1
                  %s274 = sphi %s217, %s217
                  %s275 = sphi %s212, %s212
                $region54: #{tpu_custom_call.1} parent=50 // loop_header_branch
                  %272 = sbr.rel (%p270) target = $region58
                $region55: #{tpu_custom_call.1} parent=50 // loop_body
                  _
                $region56: #{tpu_custom_call.1} parent=50 // loop_footer
                  %s273 = sadd.s32 1, %s269
                $region57: #{tpu_custom_call.1} parent=50 // loop_footer_branch
                  %268 = sbr.rel target = $region53
                $region58: #{tpu_custom_call.1} parent=50 // loop_exit
                  _
                %s277 = ssub.s32 16, 1
                loop: start=0, step=1, limit=1
                $region59: #{tpu_custom_call.1} parent=50 // loop_pre_header
                  _
                $region60: #{tpu_custom_call.1} parent=50 // loop_header
                  %s279 = sphi 0, %s283
                  %p280 = scmp.ge.s32.totalorder %s279, 1
                  %s284 = sphi %s217, %s217
                  %s285 = sphi %s212, %s212
                $region61: #{tpu_custom_call.1} parent=50 // loop_header_branch
                  %282 = sbr.rel (%p280) target = $region65
                $region62: #{tpu_custom_call.1} parent=50 // loop_body
                  %v286 = vld [vmem:[%s284] sm:%s277]
                  %287 = vst [vmem:[%s285] sm:%s277] %v286
                  %v288 = vld [vmem:[%s284 + $0x8] sm:%s277]
                  %289 = vst [vmem:[%s285 + $0x4] sm:%s277] %v288
                  %v290 = vld [vmem:[%s284 + $0x10] sm:%s277]
                  %291 = vst [vmem:[%s285 + $0x8] sm:%s277] %v290
                  %v292 = vld [vmem:[%s284 + $0x18] sm:%s277]
                  %293 = vst [vmem:[%s285 + $0xc] sm:%s277] %v292
                  %v294 = vld [vmem:[%s284 + $0x20] sm:%s277]
                  %295 = vst [vmem:[%s285 + $0x10] sm:%s277] %v294
                  %v296 = vld [vmem:[%s284 + $0x28] sm:%s277]
                  %297 = vst [vmem:[%s285 + $0x14] sm:%s277] %v296
                  %v298 = vld [vmem:[%s284 + $0x30] sm:%s277]
                  %299 = vst [vmem:[%s285 + $0x18] sm:%s277] %v298
                  %v300 = vld [vmem:[%s284 + $0x38] sm:%s277]
                  %301 = vst [vmem:[%s285 + $0x1c] sm:%s277] %v300
                  %v302 = vld [vmem:[%s284 + $0x40] sm:%s277]
                  %303 = vst [vmem:[%s285 + $0x20] sm:%s277] %v302
                  %v304 = vld [vmem:[%s284 + $0x48] sm:%s277]
                  %305 = vst [vmem:[%s285 + $0x24] sm:%s277] %v304
                  %v306 = vld [vmem:[%s284 + $0x50] sm:%s277]
                  %307 = vst [vmem:[%s285 + $0x28] sm:%s277] %v306
                  %v308 = vld [vmem:[%s284 + $0x58] sm:%s277]
                  %309 = vst [vmem:[%s285 + $0x2c] sm:%s277] %v308
                  %v310 = vld [vmem:[%s284 + $0x60] sm:%s277]
                  %311 = vst [vmem:[%s285 + $0x30] sm:%s277] %v310
                  %v312 = vld [vmem:[%s284 + $0x68] sm:%s277]
                  %313 = vst [vmem:[%s285 + $0x34] sm:%s277] %v312
                  %v314 = vld [vmem:[%s284 + $0x70] sm:%s277]
                  %315 = vst [vmem:[%s285 + $0x38] sm:%s277] %v314
                  %v316 = vld [vmem:[%s284 + $0x78] sm:%s277]
                  %317 = vst [vmem:[%s285 + $0x3c] sm:%s277] %v316
                $region63: #{tpu_custom_call.1} parent=50 // loop_footer
                  %s283 = sadd.s32 1, %s279
                $region64: #{tpu_custom_call.1} parent=50 // loop_footer_branch
                  %278 = sbr.rel target = $region60
                $region65: #{tpu_custom_call.1} parent=50 // loop_exit
                  _
              $region51: #{tpu_custom_call.1} parent=35 // pred_fallthru
                _
            $region36: #{tpu_custom_call.1} parent=31 // pred_fallthru
              _
            // Predicated region
            $region37: #{tpu_custom_call.1} parent=31 // pred_check
              _
            $region38: #{tpu_custom_call.1} parent=31 // pred_check_branch
              %223 = sbr.rel (0) target = $region40
            $region39: #{tpu_custom_call.1} parent=31 // pred_region
              %s225 = ssub.s32 16, 1
              loop: start=0, step=1, limit=1
              $region41: #{tpu_custom_call.1} parent=39 // loop_pre_header
                _
              $region42: #{tpu_custom_call.1} parent=39 // loop_header
                %s227 = sphi 0, %s231
                %p228 = scmp.ge.s32.totalorder %s227, 1
                %s232 = sphi %s217, %s217
                %s233 = sphi %s212, %s212
              $region43: #{tpu_custom_call.1} parent=39 // loop_header_branch
                %230 = sbr.rel (%p228) target = $region47
              $region44: #{tpu_custom_call.1} parent=39 // loop_body
                %v234 = vld [vmem:[%s232] sm:%s225]
                %235 = vst [vmem:[%s233] sm:%s225] %v234
                %v236 = vld [vmem:[%s232 + $0x8] sm:%s225]
                %237 = vst [vmem:[%s233 + $0x4] sm:%s225] %v236
                %v238 = vld [vmem:[%s232 + $0x10] sm:%s225]
                %239 = vst [vmem:[%s233 + $0x8] sm:%s225] %v238
                %v240 = vld [vmem:[%s232 + $0x18] sm:%s225]
                %241 = vst [vmem:[%s233 + $0xc] sm:%s225] %v240
                %v242 = vld [vmem:[%s232 + $0x20] sm:%s225]
                %243 = vst [vmem:[%s233 + $0x10] sm:%s225] %v242
                %v244 = vld [vmem:[%s232 + $0x28] sm:%s225]
                %245 = vst [vmem:[%s233 + $0x14] sm:%s225] %v244
                %v246 = vld [vmem:[%s232 + $0x30] sm:%s225]
                %247 = vst [vmem:[%s233 + $0x18] sm:%s225] %v246
                %v248 = vld [vmem:[%s232 + $0x38] sm:%s225]
                %249 = vst [vmem:[%s233 + $0x1c] sm:%s225] %v248
                %v250 = vld [vmem:[%s232 + $0x40] sm:%s225]
                %251 = vst [vmem:[%s233 + $0x20] sm:%s225] %v250
                %v252 = vld [vmem:[%s232 + $0x48] sm:%s225]
                %253 = vst [vmem:[%s233 + $0x24] sm:%s225] %v252
                %v254 = vld [vmem:[%s232 + $0x50] sm:%s225]
                %255 = vst [vmem:[%s233 + $0x28] sm:%s225] %v254
                %v256 = vld [vmem:[%s232 + $0x58] sm:%s225]
                %257 = vst [vmem:[%s233 + $0x2c] sm:%s225] %v256
                %v258 = vld [vmem:[%s232 + $0x60] sm:%s225]
                %259 = vst [vmem:[%s233 + $0x30] sm:%s225] %v258
                %v260 = vld [vmem:[%s232 + $0x68] sm:%s225]
                %261 = vst [vmem:[%s233 + $0x34] sm:%s225] %v260
                %v262 = vld [vmem:[%s232 + $0x70] sm:%s225]
                %263 = vst [vmem:[%s233 + $0x38] sm:%s225] %v262
                %v264 = vld [vmem:[%s232 + $0x78] sm:%s225]
                %265 = vst [vmem:[%s233 + $0x3c] sm:%s225] %v264
              $region45: #{tpu_custom_call.1} parent=39 // loop_footer
                %s231 = sadd.s32 1, %s227
              $region46: #{tpu_custom_call.1} parent=39 // loop_footer_branch
                %226 = sbr.rel target = $region42
              $region47: #{tpu_custom_call.1} parent=39 // loop_exit
                _
            $region40: #{tpu_custom_call.1} parent=31 // pred_fallthru
              _
          $region32: #{tpu_custom_call.1} parent=27 // pred_fallthru
            _
          %318 = vnop
        $region28: #{tpu_custom_call.1} parent=23 // pred_fallthru
          _
        // Predicated region
        $region66: #{tpu_custom_call.1} parent=23 // pred_check
          %p319 = pneg %p81
        $region67: #{tpu_custom_call.1} parent=23 // pred_check_branch
          %321 = sbr.rel (%p319) target = $region69
        $region68: #{tpu_custom_call.1} parent=23 // pred_region
          %s322 = smul.u32 16, %s29
          %p323 = scmp.lt.s32.totalorder %s322, 31
          %s324 = scalar_select %p323, %s322, 31
          %s325 = smul.addr %s324, 4
          %s326 = scalar_lea.vmem %s2, %s325
          %s327 = smul.u32 16, %s29
        $region69: #{tpu_custom_call.1} parent=23 // pred_fallthru
          _
        // Predicated region
        $region70: #{tpu_custom_call.1} parent=23 // pred_check
          %p328 = pneg %p149
        $region71: #{tpu_custom_call.1} parent=23 // pred_check_branch
          %330 = sbr.rel (%p328) target = $region73
        $region72: #{tpu_custom_call.1} parent=23 // pred_region
          %s331 = smul.u32 16, %s28
          %p332 = scmp.lt.s32.totalorder %s331, 31
          %s333 = scalar_select %p332, %s331, 31
          %s334 = smul.addr %s333, 8
          %s335 = scalar_lea.vmem %s5, %s334
          %s336 = smul.u32 16, %s28
        $region73: #{tpu_custom_call.1} parent=23 // pred_fallthru
          _
      $region24: #{tpu_custom_call.1} parent=5 // pred_fallthru
        _
      %p337 = scmp.le.s32.totalorder 1, %s21
      %p338 = scmp.lt.s32.totalorder %s21, 5
      %p339 = pnand %p337, %p338
      %p340 = pneg %p339
      // Predicated region
      $region74: #{tpu_custom_call.1} parent=5 // pred_check
        _
      $region75: #{tpu_custom_call.1} parent=5 // pred_check_branch
        %342 = sbr.rel (%p339) target = $region77
      $region76: #{tpu_custom_call.1} parent=5 // pred_region
        %s343 = ssub.s32 %s21, 1
        %s344 = sand.u32 %s48, 1
        %s345 = sand.u32 %s48, 1
        %s346 = smul.addr %s345, 64
        %s347 = scalar_lea.vmem [#allocation5], %s346
        // Predicated region
        $region78: #{tpu_custom_call.1} parent=76 // pred_check
          %p348 = pneg %p61
        $region79: #{tpu_custom_call.1} parent=76 // pred_check_branch
          %350 = sbr.rel (%p348) target = $region81
        $region80: #{tpu_custom_call.1} parent=76 // pred_region
          _
        $region81: #{tpu_custom_call.1} parent=76 // pred_fallthru
          _
        %s351 = sand.u32 %s48, 1
        %s352 = sand.u32 %s48, 1
        %s353 = smul.addr %s352, 64
        %s354 = scalar_lea.vmem [#allocation5], %s353
        %p355 = pneg %p61
        %p356 = pneg %p58
        %s357 = smul.u32 16, %s31
        %p358 = scmp.lt.s32.totalorder %s357, 31
        %s359 = scalar_select %p358, %s357, 31
        %s360 = smul.addr %s359, 4
        %s361 = scalar_lea.vmem %s2, %s360
        %p362 = pneg %p87
        %p363 = pneg %p84
        %p364 = pneg %p108
        %p365 = pneg %p105
        %p366 = pneg %p129
        %p367 = pneg %p126
        %s368 = smul.u32 16, %s30
        %p369 = scmp.lt.s32.totalorder %s368, 31
        %s370 = scalar_select %p369, %s368, 31
        %s371 = smul.addr %s370, 8
        %s372 = scalar_lea.vmem %s5, %s371
        %p373 = pneg %p155
        %p374 = pneg %p152
        %p375 = pneg %p181
        %p376 = pneg %p178
        %s377 = sand.u32 %s168, 1
        %s378 = scalar_lea.sflag [#allocation7], %s377
        %s379 = sand.u32 %s168, 1
        %s380 = smul.addr %s379, 64
        %s381 = scalar_lea.vmem [#allocation6], %s380
        %s382 = smul.u32 16, %s30
        %s383 = smul.u32 16, %s31
        %p384 = scmp.lt.s32.totalorder %s383, 31
        %s385 = scalar_select %p384, %s383, 31
        %s386 = smul.addr %s385, 4
        %s387 = scalar_lea.vmem %s2, %s386
        %s388 = smul.u32 16, %s31
        %s389 = smul.u32 16, %s30
        %p390 = scmp.lt.s32.totalorder %s389, 31
        %s391 = scalar_select %p390, %s389, 31
        %s392 = smul.addr %s391, 8
        %s393 = scalar_lea.vmem %s5, %s392
        %s394 = smul.u32 16, %s30
        %s395 = smul.u32 16, %s30
        %p397 = scmp.eq.s32.totalorder %s31, 0
        // Predicated region
        $region82: #{tpu_custom_call.1} parent=76 // pred_check
          %p398 = pneg %p397
        $region83: #{tpu_custom_call.1} parent=76 // pred_check_branch
          %400 = sbr.rel (%p398) target = $region85
        $region84: #{tpu_custom_call.1} parent=76 // pred_region
          %401 = vst [vmem:[#allocation2] sm:$0xff] 0.0
          %402 = vst [vmem:[#allocation2 + $0x8] sm:$0xff] 0.0
          %403 = vst [vmem:[#allocation2 + $0x10] sm:$0xff] 0.0
          %404 = vst [vmem:[#allocation2 + $0x18] sm:$0xff] 0.0
          %405 = vst [vmem:[#allocation2 + $0x20] sm:$0xff] 0.0
          %406 = vst [vmem:[#allocation2 + $0x28] sm:$0xff] 0.0
          %407 = vst [vmem:[#allocation2 + $0x30] sm:$0xff] 0.0
          %408 = vst [vmem:[#allocation2 + $0x38] sm:$0xff] 0.0
          %409 = vst [vmem:[#allocation2 + $0x40] sm:$0xff] 0.0
          %410 = vst [vmem:[#allocation2 + $0x48] sm:$0xff] 0.0
          %411 = vst [vmem:[#allocation2 + $0x50] sm:$0xff] 0.0
          %412 = vst [vmem:[#allocation2 + $0x58] sm:$0xff] 0.0
          %413 = vst [vmem:[#allocation2 + $0x60] sm:$0xff] 0.0
          %414 = vst [vmem:[#allocation2 + $0x68] sm:$0xff] 0.0
          %415 = vst [vmem:[#allocation2 + $0x70] sm:$0xff] 0.0
          %416 = vst [vmem:[#allocation2 + $0x78] sm:$0xff] 0.0
        $region85: #{tpu_custom_call.1} parent=76 // pred_fallthru
          _
        %s417 = smul.u32 %s30, 2
        %s418 = sadd.s32 %s417, %s31
        %s419 = sld [smem:[#allocation4 + %s418]]
        %p420 = scmp.gt.s32.totalorder %s419, 0
        // Predicated region
        $region86: #{tpu_custom_call.1} parent=76 // pred_check
          %p421 = pneg %p420
        $region87: #{tpu_custom_call.1} parent=76 // pred_check_branch
          %423 = sbr.rel (%p421) target = $region89
        $region88: #{tpu_custom_call.1} parent=76 // pred_region
          %v424 = vld [vmem:[%s387] sm:$0xf]
          %v425 = vld [vmem:[%s387 + $0x4] sm:$0xf]
          %v426 = vld [vmem:[%s387 + $0x8] sm:$0xf]
          %v427 = vld [vmem:[%s387 + $0xc] sm:$0xf]
          %v428 = vld [vmem:[%s387 + $0x10] sm:$0xf]
          %v429 = vld [vmem:[%s387 + $0x14] sm:$0xf]
          %v430 = vld [vmem:[%s387 + $0x18] sm:$0xf]
          %v431 = vld [vmem:[%s387 + $0x1c] sm:$0xf]
          %v432 = vld [vmem:[%s387 + $0x20] sm:$0xf]
          %v433 = vld [vmem:[%s387 + $0x24] sm:$0xf]
          %v434 = vld [vmem:[%s387 + $0x28] sm:$0xf]
          %v435 = vld [vmem:[%s387 + $0x2c] sm:$0xf]
          %v436 = vld [vmem:[%s387 + $0x30] sm:$0xf]
          %v437 = vld [vmem:[%s387 + $0x34] sm:$0xf]
          %v438 = vld [vmem:[%s387 + $0x38] sm:$0xf]
          %v439 = vld [vmem:[%s387 + $0x3c] sm:$0xf]
          %v440 = vld [vmem:[%s3] sm:$0xf]
          %v441 = vld [vmem:[%s3 + $0x4] sm:$0xf]
          %v458 = vunpack.c.l.b16 %v424
          %v459 = vunpack.c.l.b16 %v425
          %v460 = vunpack.c.l.b16 %v426
          %v461 = vunpack.c.l.b16 %v427
          %v462 = vunpack.c.l.b16 %v428
          %v463 = vunpack.c.l.b16 %v429
          %v464 = vunpack.c.l.b16 %v430
          %v465 = vunpack.c.l.b16 %v431
          %v466 = vunpack.c.l.b16 %v432
          %v467 = vunpack.c.l.b16 %v433
          %v468 = vunpack.c.l.b16 %v434
          %v469 = vunpack.c.l.b16 %v435
          %v470 = vunpack.c.l.b16 %v436
          %v471 = vunpack.c.l.b16 %v437
          %v472 = vunpack.c.l.b16 %v438
          %v473 = vunpack.c.l.b16 %v439
          %v474 = vpack.c.b16 %v459, %v458
          %v475 = vpack.c.b16 %v461, %v460
          %v476 = vpack.c.b16 %v463, %v462
          %v477 = vpack.c.b16 %v465, %v464
          %v478 = vpack.c.b16 %v467, %v466
          %v479 = vpack.c.b16 %v469, %v468
          %v480 = vpack.c.b16 %v471, %v470
          %v481 = vpack.c.b16 %v473, %v472
          %v484 = vunpack.c.l.b16 %v440
          %v485 = vunpack.c.l.b16 %v441
          %v486 = vpack.c.b16 %v485, %v484
          %vm488 = vcmask 130048
          %v490 = vsel %vm488, %v474, 0
          %v493 = vsel %vm488, %v475, 0
          %v496 = vsel %vm488, %v476, 0
          %v499 = vsel %vm488, %v477, 0
          %v502 = vsel %vm488, %v478, 0
          %v505 = vsel %vm488, %v479, 0
          %v508 = vsel %vm488, %v480, 0
          %v511 = vsel %vm488, %v481, 0
          %513 = vmatprep.subr.bf16.mxu0 0
          %514 = vmatpush1.bf16.msra.mxu0 0
          %515 = vmatprep.subr.bf16.mxu0 0
          %516 = vmatpush1.bf16.msra.mxu0 0
          %517 = vmatprep.subr.bf16.mxu0 0
          %518 = vmatpush1.bf16.msra.mxu0 0
          %519 = vmatprep.subr.bf16.mxu0 0
          %520 = vmatpush1.bf16.msra.mxu0 0
          %521 = vmatprep.subr.bf16.mxu0 0
          %522 = vmatpush1.bf16.msra.mxu0 0
          %523 = vmatprep.subr.bf16.mxu0 0
          %524 = vmatpush1.bf16.msra.mxu0 0
          %525 = vmatprep.subr.bf16.mxu0 0
          %526 = vmatpush1.bf16.msra.mxu0 0
          %527 = vmatprep.subr.bf16.mxu0 0
          %528 = vmatpush1.bf16.msra.mxu0 %v486
          %529 = vmatprep.subr.bf16.mxu0 0
          %530 = vmatpush2.bf16.msra.mxu0 0
          %531 = vmatprep.subr.bf16.mxu0 0
          %532 = vmatpush2.bf16.msra.mxu0 0
          %533 = vmatprep.subr.bf16.mxu0 0
          %534 = vmatpush2.bf16.msra.mxu0 0
          %535 = vmatprep.subr.bf16.mxu0 0
          %536 = vmatpush2.bf16.msra.mxu0 0
          %537 = vmatprep.subr.bf16.mxu0 0
          %538 = vmatpush2.bf16.msra.mxu0 0
          %539 = vmatprep.subr.bf16.mxu0 0
          %540 = vmatpush2.bf16.msra.mxu0 0
          %541 = vmatprep.subr.bf16.mxu0 0
          %542 = vmatpush2.bf16.msra.mxu0 0
          %543 = vmatprep.subr.bf16.mxu0 0
          %544 = vmatpush2.bf16.msra.mxu0 0
          %545 = vmatprep.mubr.bf16.mxu0 0
          %546 = vmatmul.mubr.bf16.gmra.mxu0 %v490
          %v547 = vpop.f32.mrf.mxu0
          %v548 = vadd.f32 0.0, %v547
          %v549 = vpop.f32.mrf.mxu0
          %v550 = vpop.f32.mrf.mxu0
          %v551 = vadd.f32 0.0, %v550
          %v552 = vpop.f32.mrf.mxu0
          %553 = vmatprep.mubr.bf16.mxu0 0
          %554 = vmatmul.mubr.bf16.gmra.mxu0 %v493
          %v555 = vpop.f32.mrf.mxu0
          %v556 = vadd.f32 0.0, %v555
          %v557 = vpop.f32.mrf.mxu0
          %v558 = vpop.f32.mrf.mxu0
          %v559 = vadd.f32 0.0, %v558
          %v560 = vpop.f32.mrf.mxu0
          %561 = vmatprep.mubr.bf16.mxu0 0
          %562 = vmatmul.mubr.bf16.gmra.mxu0 %v496
          %v563 = vpop.f32.mrf.mxu0
          %v564 = vadd.f32 0.0, %v563
          %v565 = vpop.f32.mrf.mxu0
          %v566 = vpop.f32.mrf.mxu0
          %v567 = vadd.f32 0.0, %v566
          %v568 = vpop.f32.mrf.mxu0
          %569 = vmatprep.mubr.bf16.mxu0 0
          %570 = vmatmul.mubr.bf16.gmra.mxu0 %v499
          %v571 = vpop.f32.mrf.mxu0
          %v572 = vadd.f32 0.0, %v571
          %v573 = vpop.f32.mrf.mxu0
          %v574 = vpop.f32.mrf.mxu0
          %v575 = vadd.f32 0.0, %v574
          %v576 = vpop.f32.mrf.mxu0
          %577 = vmatprep.mubr.bf16.mxu0 0
          %578 = vmatmul.mubr.bf16.gmra.mxu0 %v502
          %v579 = vpop.f32.mrf.mxu0
          %v580 = vadd.f32 0.0, %v579
          %v581 = vpop.f32.mrf.mxu0
          %v582 = vpop.f32.mrf.mxu0
          %v583 = vadd.f32 0.0, %v582
          %v584 = vpop.f32.mrf.mxu0
          %585 = vmatprep.mubr.bf16.mxu0 0
          %586 = vmatmul.mubr.bf16.gmra.mxu0 %v505
          %v587 = vpop.f32.mrf.mxu0
          %v588 = vadd.f32 0.0, %v587
          %v589 = vpop.f32.mrf.mxu0
          %v590 = vpop.f32.mrf.mxu0
          %v591 = vadd.f32 0.0, %v590
          %v592 = vpop.f32.mrf.mxu0
          %593 = vmatprep.mubr.bf16.mxu0 0
          %594 = vmatmul.mubr.bf16.gmra.mxu0 %v508
          %v595 = vpop.f32.mrf.mxu0
          %v596 = vadd.f32 0.0, %v595
          %v597 = vpop.f32.mrf.mxu0
          %v598 = vpop.f32.mrf.mxu0
          %v599 = vadd.f32 0.0, %v598
          %v600 = vpop.f32.mrf.mxu0
          %601 = vmatprep.mubr.bf16.mxu0 0
          %602 = vmatmul.mubr.bf16.gmra.mxu0 %v511
          %v603 = vpop.f32.mrf.mxu0
          %v604 = vadd.f32 0.0, %v603
          %v605 = vpop.f32.mrf.mxu0
          %v606 = vpop.f32.mrf.mxu0
          %v607 = vadd.f32 0.0, %v606
          %v608 = vpop.f32.mrf.mxu0
          %609 = vdwg.mxu0
          %v610 = vld [vmem:[#allocation2] sm:$0xff]
          %v611 = vld [vmem:[#allocation2 + $0x8] sm:$0xff]
          %v612 = vld [vmem:[#allocation2 + $0x10] sm:$0xff]
          %v613 = vld [vmem:[#allocation2 + $0x18] sm:$0xff]
          %v614 = vld [vmem:[#allocation2 + $0x20] sm:$0xff]
          %v615 = vld [vmem:[#allocation2 + $0x28] sm:$0xff]
          %v616 = vld [vmem:[#allocation2 + $0x30] sm:$0xff]
          %v617 = vld [vmem:[#allocation2 + $0x38] sm:$0xff]
          %v618 = vld [vmem:[#allocation2 + $0x40] sm:$0xff]
          %v619 = vld [vmem:[#allocation2 + $0x48] sm:$0xff]
          %v620 = vld [vmem:[#allocation2 + $0x50] sm:$0xff]
          %v621 = vld [vmem:[#allocation2 + $0x58] sm:$0xff]
          %v622 = vld [vmem:[#allocation2 + $0x60] sm:$0xff]
          %v623 = vld [vmem:[#allocation2 + $0x68] sm:$0xff]
          %v624 = vld [vmem:[#allocation2 + $0x70] sm:$0xff]
          %v625 = vld [vmem:[#allocation2 + $0x78] sm:$0xff]
          %v626 = vld [vmem:[%s347] sm:$0xf]
          %v627 = vld [vmem:[%s347 + $0x4] sm:$0xf]
          %v628 = vld [vmem:[%s347 + $0x8] sm:$0xf]
          %v629 = vld [vmem:[%s347 + $0xc] sm:$0xf]
          %v630 = vld [vmem:[%s347 + $0x10] sm:$0xf]
          %v631 = vld [vmem:[%s347 + $0x14] sm:$0xf]
          %v632 = vld [vmem:[%s347 + $0x18] sm:$0xf]
          %v633 = vld [vmem:[%s347 + $0x1c] sm:$0xf]
          %v634 = vld [vmem:[%s347 + $0x20] sm:$0xf]
          %v635 = vld [vmem:[%s347 + $0x24] sm:$0xf]
          %v636 = vld [vmem:[%s347 + $0x28] sm:$0xf]
          %v637 = vld [vmem:[%s347 + $0x2c] sm:$0xf]
          %v638 = vld [vmem:[%s347 + $0x30] sm:$0xf]
          %v639 = vld [vmem:[%s347 + $0x34] sm:$0xf]
          %v640 = vld [vmem:[%s347 + $0x38] sm:$0xf]
          %v641 = vld [vmem:[%s347 + $0x3c] sm:$0xf]
          %v642 = vpack.c.bf16 %v551, %v548
          %v643 = vpack.c.bf16 %v559, %v556
          %v644 = vpack.c.bf16 %v567, %v564
          %v645 = vpack.c.bf16 %v575, %v572
          %v646 = vpack.c.bf16 %v583, %v580
          %v647 = vpack.c.bf16 %v591, %v588
          %v648 = vpack.c.bf16 %v599, %v596
          %v649 = vpack.c.bf16 %v607, %v604
          %v666 = vunpack.c.l.b16 %v626
          %v667 = vunpack.c.l.b16 %v627
          %v668 = vunpack.c.l.b16 %v628
          %v669 = vunpack.c.l.b16 %v629
          %v670 = vunpack.c.l.b16 %v630
          %v671 = vunpack.c.l.b16 %v631
          %v672 = vunpack.c.l.b16 %v632
          %v673 = vunpack.c.l.b16 %v633
          %v674 = vunpack.c.l.b16 %v634
          %v675 = vunpack.c.l.b16 %v635
          %v676 = vunpack.c.l.b16 %v636
          %v677 = vunpack.c.l.b16 %v637
          %v678 = vunpack.c.l.b16 %v638
          %v679 = vunpack.c.l.b16 %v639
          %v680 = vunpack.c.l.b16 %v640
          %v681 = vunpack.c.l.b16 %v641
          %v682 = vpack.c.b16 %v667, %v666
          %v683 = vpack.c.b16 %v669, %v668
          %v684 = vpack.c.b16 %v671, %v670
          %v685 = vpack.c.b16 %v673, %v672
          %v686 = vpack.c.b16 %v675, %v674
          %v687 = vpack.c.b16 %v677, %v676
          %v688 = vpack.c.b16 %v679, %v678
          %v689 = vpack.c.b16 %v681, %v680
          %698 = vmatprep.subr.bf16.mxu0 0
          %699 = vmatpush1.bf16.msra.mxu0 %v649
          %700 = vmatprep.subr.bf16.mxu0 0
          %701 = vmatpush1.bf16.msra.mxu0 %v648
          %702 = vmatprep.subr.bf16.mxu0 0
          %703 = vmatpush1.bf16.msra.mxu0 %v647
          %704 = vmatprep.subr.bf16.mxu0 0
          %705 = vmatpush1.bf16.msra.mxu0 %v646
          %706 = vmatprep.subr.bf16.mxu0 0
          %707 = vmatpush1.bf16.msra.mxu0 %v645
          %708 = vmatprep.subr.bf16.mxu0 0
          %709 = vmatpush1.bf16.msra.mxu0 %v644
          %710 = vmatprep.subr.bf16.mxu0 0
          %711 = vmatpush1.bf16.msra.mxu0 %v643
          %712 = vmatprep.subr.bf16.mxu0 0
          %713 = vmatpush1.bf16.msra.mxu0 %v642
          %714 = vmatprep.subr.bf16.mxu0 0
          %715 = vmatpush2.bf16.msra.mxu0 0
          %716 = vmatprep.subr.bf16.mxu0 0
          %717 = vmatpush2.bf16.msra.mxu0 0
          %718 = vmatprep.subr.bf16.mxu0 0
          %719 = vmatpush2.bf16.msra.mxu0 0
          %720 = vmatprep.subr.bf16.mxu0 0
          %721 = vmatpush2.bf16.msra.mxu0 0
          %722 = vmatprep.subr.bf16.mxu0 0
          %723 = vmatpush2.bf16.msra.mxu0 0
          %724 = vmatprep.subr.bf16.mxu0 0
          %725 = vmatpush2.bf16.msra.mxu0 0
          %726 = vmatprep.subr.bf16.mxu0 0
          %727 = vmatpush2.bf16.msra.mxu0 0
          %728 = vmatprep.subr.bf16.mxu0 0
          %729 = vmatpush2.bf16.msra.mxu0 0
          %730 = vmatprep.mubr.bf16.mxu0 0
          %731 = vmatmul.mubr.bf16.gmra.mxu0 %v682
          %v732 = vpop.f32.mrf.mxu0
          %v733 = vadd.f32 0.0, %v732
          %v734 = vpop.f32.mrf.mxu0
          %v735 = vpop.f32.mrf.mxu0
          %v736 = vadd.f32 0.0, %v735
          %v737 = vpop.f32.mrf.mxu0
          %738 = vmatprep.mubr.bf16.mxu0 0
          %739 = vmatmul.mubr.bf16.gmra.mxu0 %v683
          %v740 = vpop.f32.mrf.mxu0
          %v741 = vadd.f32 0.0, %v740
          %v742 = vpop.f32.mrf.mxu0
          %v743 = vpop.f32.mrf.mxu0
          %v744 = vadd.f32 0.0, %v743
          %v745 = vpop.f32.mrf.mxu0
          %746 = vmatprep.mubr.bf16.mxu0 0
          %747 = vmatmul.mubr.bf16.gmra.mxu0 %v684
          %v748 = vpop.f32.mrf.mxu0
          %v749 = vadd.f32 0.0, %v748
          %v750 = vpop.f32.mrf.mxu0
          %v751 = vpop.f32.mrf.mxu0
          %v752 = vadd.f32 0.0, %v751
          %v753 = vpop.f32.mrf.mxu0
          %754 = vmatprep.mubr.bf16.mxu0 0
          %755 = vmatmul.mubr.bf16.gmra.mxu0 %v685
          %v756 = vpop.f32.mrf.mxu0
          %v757 = vadd.f32 0.0, %v756
          %v758 = vpop.f32.mrf.mxu0
          %v759 = vpop.f32.mrf.mxu0
          %v760 = vadd.f32 0.0, %v759
          %v761 = vpop.f32.mrf.mxu0
          %762 = vmatprep.mubr.bf16.mxu0 0
          %763 = vmatmul.mubr.bf16.gmra.mxu0 %v686
          %v764 = vpop.f32.mrf.mxu0
          %v765 = vadd.f32 0.0, %v764
          %v766 = vpop.f32.mrf.mxu0
          %v767 = vpop.f32.mrf.mxu0
          %v768 = vadd.f32 0.0, %v767
          %v769 = vpop.f32.mrf.mxu0
          %770 = vmatprep.mubr.bf16.mxu0 0
          %771 = vmatmul.mubr.bf16.gmra.mxu0 %v687
          %v772 = vpop.f32.mrf.mxu0
          %v773 = vadd.f32 0.0, %v772
          %v774 = vpop.f32.mrf.mxu0
          %v775 = vpop.f32.mrf.mxu0
          %v776 = vadd.f32 0.0, %v775
          %v777 = vpop.f32.mrf.mxu0
          %778 = vmatprep.mubr.bf16.mxu0 0
          %779 = vmatmul.mubr.bf16.gmra.mxu0 %v688
          %v780 = vpop.f32.mrf.mxu0
          %v781 = vadd.f32 0.0, %v780
          %v782 = vpop.f32.mrf.mxu0
          %v783 = vpop.f32.mrf.mxu0
          %v784 = vadd.f32 0.0, %v783
          %v785 = vpop.f32.mrf.mxu0
          %786 = vmatprep.mubr.bf16.mxu0 0
          %787 = vmatmul.mubr.bf16.gmra.mxu0 %v689
          %v788 = vpop.f32.mrf.mxu0
          %v789 = vadd.f32 0.0, %v788
          %v790 = vpop.f32.mrf.mxu0
          %v791 = vpop.f32.mrf.mxu0
          %v792 = vadd.f32 0.0, %v791
          %v793 = vpop.f32.mrf.mxu0
          %794 = vdwg.mxu0
          %v795 = vadd.f32 %v610, %v733
          %v796 = vadd.f32 %v611, %v736
          %v797 = vadd.f32 %v612, %v741
          %v798 = vadd.f32 %v613, %v744
          %v799 = vadd.f32 %v614, %v749
          %v800 = vadd.f32 %v615, %v752
          %v801 = vadd.f32 %v616, %v757
          %v802 = vadd.f32 %v617, %v760
          %v803 = vadd.f32 %v618, %v765
          %v804 = vadd.f32 %v619, %v768
          %v805 = vadd.f32 %v620, %v773
          %v806 = vadd.f32 %v621, %v776
          %v807 = vadd.f32 %v622, %v781
          %v808 = vadd.f32 %v623, %v784
          %v809 = vadd.f32 %v624, %v789
          %v810 = vadd.f32 %v625, %v792
          %811 = vst [vmem:[#allocation2] sm:$0xff] %v795
          %812 = vst [vmem:[#allocation2 + $0x8] sm:$0xff] %v796
          %813 = vst [vmem:[#allocation2 + $0x10] sm:$0xff] %v797
          %814 = vst [vmem:[#allocation2 + $0x18] sm:$0xff] %v798
          %815 = vst [vmem:[#allocation2 + $0x20] sm:$0xff] %v799
          %816 = vst [vmem:[#allocation2 + $0x28] sm:$0xff] %v800
          %817 = vst [vmem:[#allocation2 + $0x30] sm:$0xff] %v801
          %818 = vst [vmem:[#allocation2 + $0x38] sm:$0xff] %v802
          %819 = vst [vmem:[#allocation2 + $0x40] sm:$0xff] %v803
          %820 = vst [vmem:[#allocation2 + $0x48] sm:$0xff] %v804
          %821 = vst [vmem:[#allocation2 + $0x50] sm:$0xff] %v805
          %822 = vst [vmem:[#allocation2 + $0x58] sm:$0xff] %v806
          %823 = vst [vmem:[#allocation2 + $0x60] sm:$0xff] %v807
          %824 = vst [vmem:[#allocation2 + $0x68] sm:$0xff] %v808
          %825 = vst [vmem:[#allocation2 + $0x70] sm:$0xff] %v809
          %826 = vst [vmem:[#allocation2 + $0x78] sm:$0xff] %v810
        $region89: #{tpu_custom_call.1} parent=76 // pred_fallthru
          _
        %p827 = scmp.eq.s32.totalorder %s31, 1
        // Predicated region
        $region90: #{tpu_custom_call.1} parent=76 // pred_check
          %p828 = pneg %p827
        $region91: #{tpu_custom_call.1} parent=76 // pred_check_branch
          %830 = sbr.rel (%p828) target = $region93
        $region92: #{tpu_custom_call.1} parent=76 // pred_region
          %v831 = vld [vmem:[%s393] sm:$0xff]
          %v832 = vld [vmem:[%s393 + $0x8] sm:$0xff]
          %v833 = vld [vmem:[%s393 + $0x10] sm:$0xff]
          %v834 = vld [vmem:[%s393 + $0x18] sm:$0xff]
          %v835 = vld [vmem:[%s393 + $0x20] sm:$0xff]
          %v836 = vld [vmem:[%s393 + $0x28] sm:$0xff]
          %v837 = vld [vmem:[%s393 + $0x30] sm:$0xff]
          %v838 = vld [vmem:[%s393 + $0x38] sm:$0xff]
          %v839 = vld [vmem:[%s393 + $0x40] sm:$0xff]
          %v840 = vld [vmem:[%s393 + $0x48] sm:$0xff]
          %v841 = vld [vmem:[%s393 + $0x50] sm:$0xff]
          %v842 = vld [vmem:[%s393 + $0x58] sm:$0xff]
          %v843 = vld [vmem:[%s393 + $0x60] sm:$0xff]
          %v844 = vld [vmem:[%s393 + $0x68] sm:$0xff]
          %v845 = vld [vmem:[%s393 + $0x70] sm:$0xff]
          %v846 = vld [vmem:[%s393 + $0x78] sm:$0xff]
          %v847 = vld [vmem:[#allocation2] sm:$0xff]
          %v848 = vld [vmem:[#allocation2 + $0x8] sm:$0xff]
          %v849 = vld [vmem:[#allocation2 + $0x10] sm:$0xff]
          %v850 = vld [vmem:[#allocation2 + $0x18] sm:$0xff]
          %v851 = vld [vmem:[#allocation2 + $0x20] sm:$0xff]
          %v852 = vld [vmem:[#allocation2 + $0x28] sm:$0xff]
          %v853 = vld [vmem:[#allocation2 + $0x30] sm:$0xff]
          %v854 = vld [vmem:[#allocation2 + $0x38] sm:$0xff]
          %v855 = vld [vmem:[#allocation2 + $0x40] sm:$0xff]
          %v856 = vld [vmem:[#allocation2 + $0x48] sm:$0xff]
          %v857 = vld [vmem:[#allocation2 + $0x50] sm:$0xff]
          %v858 = vld [vmem:[#allocation2 + $0x58] sm:$0xff]
          %v859 = vld [vmem:[#allocation2 + $0x60] sm:$0xff]
          %v860 = vld [vmem:[#allocation2 + $0x68] sm:$0xff]
          %v861 = vld [vmem:[#allocation2 + $0x70] sm:$0xff]
          %v862 = vld [vmem:[#allocation2 + $0x78] sm:$0xff]
          %864 = vset.pattern.permute.xlu0 0
          %865 = vperm.xlu0 %864, %v831
          %v866 = vpop.permute.xlu0 %865
          %869 = vset.pattern.permute.xlu0 0
          %870 = vperm.xlu0 %869, %v832
          %v871 = vpop.permute.xlu0 %870
          %874 = vset.pattern.permute.xlu0 0
          %875 = vperm.xlu0 %874, %v833
          %v876 = vpop.permute.xlu0 %875
          %879 = vset.pattern.permute.xlu0 0
          %880 = vperm.xlu0 %879, %v834
          %v881 = vpop.permute.xlu0 %880
          %884 = vset.pattern.permute.xlu0 0
          %885 = vperm.xlu0 %884, %v835
          %v886 = vpop.permute.xlu0 %885
          %889 = vset.pattern.permute.xlu0 0
          %890 = vperm.xlu0 %889, %v836
          %v891 = vpop.permute.xlu0 %890
          %894 = vset.pattern.permute.xlu0 0
          %895 = vperm.xlu0 %894, %v837
          %v896 = vpop.permute.xlu0 %895
          %899 = vset.pattern.permute.xlu0 0
          %900 = vperm.xlu0 %899, %v838
          %v901 = vpop.permute.xlu0 %900
          %904 = vset.pattern.permute.xlu0 0
          %905 = vperm.xlu0 %904, %v839
          %v906 = vpop.permute.xlu0 %905
          %909 = vset.pattern.permute.xlu0 0
          %910 = vperm.xlu0 %909, %v840
          %v911 = vpop.permute.xlu0 %910
          %914 = vset.pattern.permute.xlu0 0
          %915 = vperm.xlu0 %914, %v841
          %v916 = vpop.permute.xlu0 %915
          %919 = vset.pattern.permute.xlu0 0
          %920 = vperm.xlu0 %919, %v842
          %v921 = vpop.permute.xlu0 %920
          %924 = vset.pattern.permute.xlu0 0
          %925 = vperm.xlu0 %924, %v843
          %v926 = vpop.permute.xlu0 %925
          %929 = vset.pattern.permute.xlu0 0
          %930 = vperm.xlu0 %929, %v844
          %v931 = vpop.permute.xlu0 %930
          %934 = vset.pattern.permute.xlu0 0
          %935 = vperm.xlu0 %934, %v845
          %v936 = vpop.permute.xlu0 %935
          %939 = vset.pattern.permute.xlu0 0
          %940 = vperm.xlu0 %939, %v846
          %v941 = vpop.permute.xlu0 %940
          %v943 = vmul.f32 %v866, %v847
          %v944 = vmul.f32 %v871, %v848
          %v945 = vmul.f32 %v876, %v849
          %v946 = vmul.f32 %v881, %v850
          %v947 = vmul.f32 %v886, %v851
          %v948 = vmul.f32 %v891, %v852
          %v949 = vmul.f32 %v896, %v853
          %v950 = vmul.f32 %v901, %v854
          %v951 = vmul.f32 %v906, %v855
          %v952 = vmul.f32 %v911, %v856
          %v953 = vmul.f32 %v916, %v857
          %v954 = vmul.f32 %v921, %v858
          %v955 = vmul.f32 %v926, %v859
          %v956 = vmul.f32 %v931, %v860
          %v957 = vmul.f32 %v936, %v861
          %v958 = vmul.f32 %v941, %v862
          %v959 = vld [vmem:[%s4] sm:$0x1]
          %v961 = vlaneseq
          %v962 = vshrl.u32 %v961, 7
          %v963 = vsub.s32 0, %v962
          %v964 = vrot.slane %v959, %v963
          %v966 = vadd.f32 %v943, %v964
          %v967 = vadd.f32 %v944, %v964
          %v968 = vadd.f32 %v945, %v964
          %v969 = vadd.f32 %v946, %v964
          %v970 = vadd.f32 %v947, %v964
          %v971 = vadd.f32 %v948, %v964
          %v972 = vadd.f32 %v949, %v964
          %v973 = vadd.f32 %v950, %v964
          %v974 = vadd.f32 %v951, %v964
          %v975 = vadd.f32 %v952, %v964
          %v976 = vadd.f32 %v953, %v964
          %v977 = vadd.f32 %v954, %v964
          %v978 = vadd.f32 %v955, %v964
          %v979 = vadd.f32 %v956, %v964
          %v980 = vadd.f32 %v957, %v964
          %v981 = vadd.f32 %v958, %v964
          %v982 = vmax.f32 %v966, 0.0
          %v983 = vmax.f32 %v967, 0.0
          %v984 = vmax.f32 %v968, 0.0
          %v985 = vmax.f32 %v969, 0.0
          %v986 = vmax.f32 %v970, 0.0
          %v987 = vmax.f32 %v971, 0.0
          %v988 = vmax.f32 %v972, 0.0
          %v989 = vmax.f32 %v973, 0.0
          %v990 = vmax.f32 %v974, 0.0
          %v991 = vmax.f32 %v975, 0.0
          %v992 = vmax.f32 %v976, 0.0
          %v993 = vmax.f32 %v977, 0.0
          %v994 = vmax.f32 %v978, 0.0
          %v995 = vmax.f32 %v979, 0.0
          %v996 = vmax.f32 %v980, 0.0
          %v997 = vmax.f32 %v981, 0.0
          %v998 = vpack.c.bf16 %v983, %v982
          %v999 = vpack.c.bf16 %v985, %v984
          %v1000 = vpack.c.bf16 %v987, %v986
          %v1001 = vpack.c.bf16 %v989, %v988
          %v1002 = vpack.c.bf16 %v991, %v990
          %v1003 = vpack.c.bf16 %v993, %v992
          %v1004 = vpack.c.bf16 %v995, %v994
          %v1005 = vpack.c.bf16 %v997, %v996
          %v1014 = vunpack.c.l.b16 %v998
          %v1015 = vunpack.c.h.b16 %v998
          %v1016 = vunpack.c.l.b16 %v999
          %v1017 = vunpack.c.h.b16 %v999
          %v1018 = vunpack.c.l.b16 %v1000
          %v1019 = vunpack.c.h.b16 %v1000
          %v1020 = vunpack.c.l.b16 %v1001
          %v1021 = vunpack.c.h.b16 %v1001
          %v1022 = vunpack.c.l.b16 %v1002
          %v1023 = vunpack.c.h.b16 %v1002
          %v1024 = vunpack.c.l.b16 %v1003
          %v1025 = vunpack.c.h.b16 %v1003
          %v1026 = vunpack.c.l.b16 %v1004
          %v1027 = vunpack.c.h.b16 %v1004
          %v1028 = vunpack.c.l.b16 %v1005
          %v1029 = vunpack.c.h.b16 %v1005
          %v1030 = vpack.c.b16 %v1014, %v1014
          %v1031 = vpack.c.b16 %v1015, %v1015
          %v1032 = vpack.c.b16 %v1016, %v1016
          %v1033 = vpack.c.b16 %v1017, %v1017
          %v1034 = vpack.c.b16 %v1018, %v1018
          %v1035 = vpack.c.b16 %v1019, %v1019
          %v1036 = vpack.c.b16 %v1020, %v1020
          %v1037 = vpack.c.b16 %v1021, %v1021
          %v1038 = vpack.c.b16 %v1022, %v1022
          %v1039 = vpack.c.b16 %v1023, %v1023
          %v1040 = vpack.c.b16 %v1024, %v1024
          %v1041 = vpack.c.b16 %v1025, %v1025
          %v1042 = vpack.c.b16 %v1026, %v1026
          %v1043 = vpack.c.b16 %v1027, %v1027
          %v1044 = vpack.c.b16 %v1028, %v1028
          %v1045 = vpack.c.b16 %v1029, %v1029
          %1062 = vst [vmem:[%s381] sm:$0xf] %v1030
          %1063 = vst [vmem:[%s381 + $0x4] sm:$0xf] %v1031
          %1064 = vst [vmem:[%s381 + $0x8] sm:$0xf] %v1032
          %1065 = vst [vmem:[%s381 + $0xc] sm:$0xf] %v1033
          %1066 = vst [vmem:[%s381 + $0x10] sm:$0xf] %v1034
          %1067 = vst [vmem:[%s381 + $0x14] sm:$0xf] %v1035
          %1068 = vst [vmem:[%s381 + $0x18] sm:$0xf] %v1036
          %1069 = vst [vmem:[%s381 + $0x1c] sm:$0xf] %v1037
          %1070 = vst [vmem:[%s381 + $0x20] sm:$0xf] %v1038
          %1071 = vst [vmem:[%s381 + $0x24] sm:$0xf] %v1039
          %1072 = vst [vmem:[%s381 + $0x28] sm:$0xf] %v1040
          %1073 = vst [vmem:[%s381 + $0x2c] sm:$0xf] %v1041
          %1074 = vst [vmem:[%s381 + $0x30] sm:$0xf] %v1042
          %1075 = vst [vmem:[%s381 + $0x34] sm:$0xf] %v1043
          %1076 = vst [vmem:[%s381 + $0x38] sm:$0xf] %v1044
          %1077 = vst [vmem:[%s381 + $0x3c] sm:$0xf] %v1045
        $region93: #{tpu_custom_call.1} parent=76 // pred_fallthru
          _
        %s1078 = sand.u32 %s168, 1
        %s1079 = scalar_lea.sflag [#allocation7], %s1078
        %s1080 = sand.u32 %s168, 1
        %s1081 = smul.addr %s1080, 64
        %s1082 = scalar_lea.vmem [#allocation6], %s1081
        // Predicated region
        $region94: #{tpu_custom_call.1} parent=76 // pred_check
          %p1083 = pneg %p178
        $region95: #{tpu_custom_call.1} parent=76 // pred_check_branch
          %1085 = sbr.rel (%p1083) target = $region97
        $region96: #{tpu_custom_call.1} parent=76 // pred_region
          %s1086 = smul.u32 16, %s30
          %s1088 = ssub.s32 1024, 1024
          %1089 = vsyncadd %s1079, %s1088
          %s1090 = smul.addr %s1086, 64
          %s1091 = scalar_lea.hbm %s6, %s1090
          %s1092 = sshll.u32 %s1082, 4
          %s1093 = int_to_ptr.vmem [resolvable:$true] %s1092
          %1098 = dma.vmem_to_hbm [thread:$0]  %s1093, 1024, %s1091, %s1079, 64, 64, 4
        $region97: #{tpu_custom_call.1} parent=76 // pred_fallthru
          _
      $region77: #{tpu_custom_call.1} parent=5 // pred_fallthru
        _
      %p1099 = scmp.le.s32.totalorder 2, %s21
      // Predicated region
      $region98: #{tpu_custom_call.1} parent=5 // pred_check
        %p1100 = pneg %p1099
      $region99: #{tpu_custom_call.1} parent=5 // pred_check_branch
        %1102 = sbr.rel (%p1100) target = $region101
      $region100: #{tpu_custom_call.1} parent=5 // pred_region
        %s1103 = ssub.s32 %s21, 2
        // Predicated region
        $region102: #{tpu_custom_call.1} parent=100 // pred_check
          %p1104 = pneg %p184
        $region103: #{tpu_custom_call.1} parent=100 // pred_check_branch
          %1106 = sbr.rel (%p1104) target = $region105
        $region104: #{tpu_custom_call.1} parent=100 // pred_region
          %s1107 = sand.u32 %s169, 1
          %s1108 = scalar_lea.sflag [#allocation7], %s1107
          %s1109 = sand.u32 %s169, 1
          %s1110 = smul.addr %s1109, 64
          %s1111 = scalar_lea.vmem [#allocation6], %s1110
          %1112 = dma.done %s1108, 1024
        $region105: #{tpu_custom_call.1} parent=100 // pred_fallthru
          _
      $region101: #{tpu_custom_call.1} parent=5 // pred_fallthru
        _
    $region6: #{tpu_custom_call.1} parent=1 // loop_footer
      %s25 = sadd.s32 1, %s21
    $region7: #{tpu_custom_call.1} parent=1 // loop_footer_branch
      %20 = sbr.rel target = $region3
    $region8: #{tpu_custom_call.1} parent=1 // loop_exit
      _
    %1113 = vsyncpa [#allocation7], 1
    %s1114 = scalar_lea.sflag [#allocation7], 1
    %1115 = vsyncpa %s1114, 1

</llo_original>
